<compile_context>
chip_gen: v7x
topology: tpu7x:2x2x1
jax: 0.10.0
libtpu: 0.0.40
codegen_flags: <defaults>
</compile_context>

<pallas_src>
import math

import jax
import jax.numpy as jnp
from jax.experimental import pallas as pl
from jax.experimental.pallas import tpu as pltpu


def _gelu_tanh(x):
    # Exact match of torch.nn.functional.gelu(x, approximate='tanh')
    c = math.sqrt(2.0 / math.pi)
    return 0.5 * x * (1.0 + jnp.tanh(c * (x + 0.044715 * x * x * x)))


def gemma_mlp_kernel(x_ref, wg_ref, wu_ref, wd_ref, o_ref, acc_ref):
    # x_ref:   (tm, H)      token tile (block index constant across k)
    # wg_ref:  (H, ti)      gate_proj weight slice for this k-step
    # wu_ref:  (H, ti)      up_proj   weight slice for this k-step
    # wd_ref:  (ti, H)      down_proj weight slice for this k-step
    # o_ref:   (tm, H)      output tile (same block across k -> resident)
    # acc_ref: (tm, H) f32  accumulator scratch
    k = pl.program_id(1)

    @pl.when(k == 0)
    def _init():
        acc_ref[...] = jnp.zeros_like(acc_ref)

    x = x_ref[...]
    gate = jnp.dot(x, wg_ref[...], preferred_element_type=jnp.float32)
    up = jnp.dot(x, wu_ref[...], preferred_element_type=jnp.float32)
    hidden = _gelu_tanh(gate) * up                     # f32 epilogue (v5e-safe)
    acc_ref[...] += jnp.dot(hidden.astype(wd_ref.dtype), wd_ref[...],
                            preferred_element_type=jnp.float32)

    @pl.when(k == pl.num_programs(1) - 1)
    def _finalize():
        o_ref[...] = acc_ref[...].astype(o_ref.dtype)


# --------------------------------------------------------------------------- #
# Tiling / budgeting helpers
# --------------------------------------------------------------------------- #
def _sublane_multiple(dtype):
    # Second-to-last block dim must be a multiple of 8 (f32) / 16 (bf16) / 32 (i8).
    return {4: 8, 2: 16, 1: 32}.get(jnp.dtype(dtype).itemsize, 8)


def _round_up(x, m):
    return ((x + m - 1) // m) * m


def _pick_tile(dim, preferred, multiple):
    """Largest t <= preferred with t % multiple == 0 and dim % t == 0, else None."""
    t = min(preferred, dim)
    t -= t % multiple
    while t >= multiple:
        if dim % t == 0:
            return t
        t -= multiple
    return None


def _tpu_vmem_capacity():
    try:
        return int(pltpu.get_tpu_info().vmem_capacity_bytes)
    except Exception:
        return 64 << 20          # v7x per-TC VMEM (smallest generation) -> conservative


def _preferred_tm():
    """Per-generation token-tile target:
       v6e -> 1024 (flips weight streaming to MXU-bound),
       v5e -> 512  (already at its ~240 flop/B roofline balance point),
       v7x -> 512  (64 MiB VMEM per TC)."""
    kind = ""
    try:
        kind = jax.devices()[0].device_kind.lower()
    except Exception:
        pass
    cap = _tpu_vmem_capacity()
    if "v5e" in kind or "v5 lite" in kind or "v5lite" in kind:
        return 512
    if cap <= (80 << 20):        # v7x: 64 MiB per TC
        return 512
    return 1024                  # v6e / v5e-sized 128 MiB VMEM


def _vmem_need_bytes(tm, ti, H, bx, bw):
    # BlockSpec double-buffers every input/output tile; the f32 accumulator and
    # the in-kernel f32 dot temporaries (gate, up, hidden + cast copy) are
    # single-buffered.
    return (2 * tm * H * bx            # x tile
            + 2 * H * ti * bw          # gate weight slice
            + 2 * H * ti * bw          # up weight slice
            + 2 * ti * H * bw          # down-proj weight slice
            + 2 * tm * H * bx          # output tile
            + tm * H * 4               # f32 accumulator scratch
            + 2 * tm * ti * 4          # gate/up f32 dot results
            + tm * ti * (4 + bw))      # hidden f32 + cast for the down-proj dot


# --------------------------------------------------------------------------- #
# Wrapper
# --------------------------------------------------------------------------- #
def gemma_mlp(x, w_gate, w_up, w_down, *, tm=None, ti=None):
    """x: [B, S, H]; w_gate/w_up: [H, I]; w_down: [I, H] -> [B, S, H]."""
    B, S, H = x.shape
    I = w_gate.shape[1]
    assert w_gate.shape == (H, I) and w_up.shape == (H, I) and w_down.shape == (I, H)

    bx = jnp.dtype(x.dtype).itemsize
    bw = jnp.dtype(w_down.dtype).itemsize
    sub_x = _sublane_multiple(x.dtype)
    sub_w = _sublane_multiple(w_down.dtype)

    # ---- intermediate-dim tile: lane-dense (multiple of 128, prefer 256). ----
    if ti is None:
        ti = _pick_tile(I, 512, 256) or _pick_tile(I, 512, 128)
    assert ti is not None and I % ti == 0 and ti % max(128, sub_w) == 0, (
        f"intermediate_size={I} must admit a 128-aligned tile (got ti={ti})")

    # ---- token tile: per-generation target, shrunk to the VMEM budget. ------
    M = B * S
    cap = _tpu_vmem_capacity()
    budget = int(0.8 * cap)
    if tm is None:
        tm = min(_preferred_tm(), _round_up(M, sub_x))
        tm = _round_up(tm, sub_x)
        while tm > sub_x and _vmem_need_bytes(tm, ti, H, bx, bw) > budget:
            tm = max(sub_x, (tm // 2) // sub_x * sub_x)
    assert tm % sub_x == 0, f"token tile {tm} must be a multiple of {sub_x}"

    # Pad the token count to a multiple of tm (zero rows are exact no-ops
    # through the MLP and are sliced off below) instead of falling back to a
    # giant full-M tile.
    Mp = _round_up(M, tm)
    xf = x.reshape(M, H)
    if Mp != M:
        xf = jnp.pad(xf, ((0, Mp - M), (0, 0)))

    nk = I // ti
    grid = (Mp // tm, nk)     # token axis first ("parallel"), I-reduction last

    flops = 6 * Mp * H * I              # three projections, 2*M*H*I flops each
    transcendentals = Mp * I            # tanh inside the gelu
    bytes_accessed = int(
        Mp * H * bx * 2                           # x in + y out
        + (Mp // tm) * 3 * H * I * bw)            # weights restreamed per token tile

    vmem_limit = int(min(max(_vmem_need_bytes(tm, ti, H, bx, bw) + (8 << 20),
                             32 << 20),
                         0.9 * cap))

    # TODO(synk): for decode-sized M on v7x (Mp // tm == 1) the "parallel" token
    # axis cannot shard across the 2 TensorCores; a CORE_PARALLEL split of the
    # I-reduction (per-core partial (tm, H) sums) would roughly halve decode
    # latency. Likewise, Buffered(1) on the x/out specs could reclaim VMEM.
    out_flat = pl.pallas_call(
        gemma_mlp_kernel,
        out_shape=jax.ShapeDtypeStruct((Mp, H), x.dtype),
        grid_spec=pltpu.PrefetchScalarGridSpec(
            num_scalar_prefetch=0,
            grid=grid,
            in_specs=[
                pl.BlockSpec((tm, H), lambda i, k: (i, 0)),    # x tile
                pl.BlockSpec((H, ti), lambda i, k: (0, k)),    # gate_proj slice
                pl.BlockSpec((H, ti), lambda i, k: (0, k)),    # up_proj slice
                pl.BlockSpec((ti, H), lambda i, k: (k, 0)),    # down_proj slice
            ],
            out_specs=pl.BlockSpec((tm, H), lambda i, k: (i, 0)),
            scratch_shapes=[pltpu.VMEM((tm, H), jnp.float32)],
        ),
        compiler_params=pltpu.CompilerParams(
            dimension_semantics=("parallel", "arbitrary"),
            vmem_limit_bytes=vmem_limit,
        ),
        cost_estimate=pl.CostEstimate(
            flops=flops,
            transcendentals=transcendentals,
            bytes_accessed=bytes_accessed),
    )(xf, w_gate, w_up, w_down)

    if Mp != M:
        out_flat = out_flat[:M]
    return out_flat.reshape(B, S, H)


def _reference(x, w_gate, w_up, w_down):
    gate = jnp.einsum("bsh,hi->bsi", x, w_gate)
    up = jnp.einsum("bsh,hi->bsi", x, w_up)
    return jnp.einsum("bsi,ih->bsh", _gelu_tanh(gate) * up, w_down)


if __name__ == "__main__":
    # Small deterministic config (tiny Gemma-like), sized to exercise both
    # grid axes (multiple token tiles AND multiple I-reduction steps).
    B, S = 2, 8
    hidden_size = 128
    intermediate_size = 256

    key = jax.random.PRNGKey(0)
    kx, kg, ku, kd = jax.random.split(key, 4)

    x = jax.random.normal(kx, (B, S, hidden_size), dtype=jnp.float32)

    # nn.Linear-style init (uniform 1/sqrt(fan_in)), stored [in, out].
    def init_w(k, fan_in, fan_out):
        bound = 1.0 / math.sqrt(fan_in)
        return jax.random.uniform(k, (fan_in, fan_out), jnp.float32,
                                  minval=-bound, maxval=bound)

    w_gate = init_w(kg, hidden_size, intermediate_size)
    w_up = init_w(ku, hidden_size, intermediate_size)
    w_down = init_w(kd, intermediate_size, hidden_size)

    y_ref = _reference(x, w_gate, w_up, w_down)

    # 1) f32, explicit tiles tm=8, ti=128 -> grid (2, 2); exercises accumulator
    #    init/finalize across the I-reduction axis. Tolerance covers TPU MXU
    #    default (bf16-pass) matmul precision for f32 inputs.
    y = gemma_mlp(x, w_gate, w_up, w_down, tm=8, ti=128)
    y = jax.block_until_ready(y)
    assert y.shape == (B, S, hidden_size)
    assert jnp.allclose(y, y_ref, atol=1e-2, rtol=1e-2)

    # 2) f32, default (per-generation) tiles + non-multiple token count to
    #    exercise the zero-padding path.
    x_odd = x[:, :5]
    y_odd = gemma_mlp(x_odd, w_gate, w_up, w_down)
    y_odd = jax.block_until_ready(y_odd)
    assert y_odd.shape == (B, 5, hidden_size)
    assert jnp.allclose(y_odd, _reference(x_odd, w_gate, w_up, w_down),
                        atol=1e-2, rtol=1e-2)

    # 3) bf16 (production dtype): bf16 MXU matmuls with f32 accumulation.
    #    bf16 rounding of x / weights / hidden means it will not bit-match the
    #    all-f32 reference; loose tolerance documents the expected ~1% error.
    yb = gemma_mlp(x.astype(jnp.bfloat16),
                   w_gate.astype(jnp.bfloat16),
                   w_up.astype(jnp.bfloat16),
                   w_down.astype(jnp.bfloat16))
    yb = jax.block_until_ready(yb)
    assert yb.shape == (B, S, hidden_size)
    assert jnp.allclose(yb.astype(jnp.float32), y_ref, atol=1e-1, rtol=1e-1)

    print("KERNEL_OK")
</pallas_src>

<mosaic_0001>
module attributes {stable_mosaic.version = 11 : i64} {
  func.func @gemma_mlp_kernel(%arg0: i32, %arg1: i32, %arg2: memref<8x128xf32, #tpu.memory_space<vmem>>, %arg3: memref<128x128xf32, #tpu.memory_space<vmem>>, %arg4: memref<128x128xf32, #tpu.memory_space<vmem>>, %arg5: memref<128x128xf32, #tpu.memory_space<vmem>>, %arg6: memref<8x128xf32, #tpu.memory_space<vmem>>, %arg7: memref<8x128xf32, #tpu.memory_space<vmem>>) attributes {dimension_semantics = [#tpu.dimension_semantics<parallel>, #tpu.dimension_semantics<arbitrary>], iteration_bounds = array<i64: 2, 2>, scalar_prefetch = 0 : i64, scratch_operands = 1 : i64, tpu.core_type = #tpu.core_type<tc>, window_params = [{transform_indices = @transform_0, window_bounds = array<i64: 8, 128>}, {transform_indices = @transform_1, window_bounds = array<i64: 128, 128>}, {transform_indices = @transform_2, window_bounds = array<i64: 128, 128>}, {transform_indices = @transform_3, window_bounds = array<i64: 128, 128>}, {transform_indices = @transform_4, window_bounds = array<i64: 8, 128>}]} {
    %c0_i32 = arith.constant 0 : i32
    %0 = arith.cmpi eq, %arg1, %c0_i32 : i32
    %1 = arith.extui %0 : i1 to i32
    %c0_i32_0 = arith.constant 0 : i32
    %2 = arith.cmpi ne, %1, %c0_i32_0 : i32
    scf.if %2 {
      %cst_19 = arith.constant 0.000000e+00 : f32
      %30 = vector.broadcast %cst_19 : f32 to vector<8x128xf32>
      %c0_20 = arith.constant 0 : index
      %c0_21 = arith.constant 0 : index
      %31 = vector.load %arg7[%c0_20, %c0_21] : memref<8x128xf32, #tpu.memory_space<vmem>>, vector<8x128xf32>
      tpu.vector_store %arg7[%c0_20, %c0_21], %30 {strides = array<i32>} : memref<8x128xf32, #tpu.memory_space<vmem>>, vector<8x128xf32>,
    } else {
    }
    %c0 = arith.constant 0 : index
    %c0_1 = arith.constant 0 : index
    %3 = vector.load %arg2[%c0, %c0_1] : memref<8x128xf32, #tpu.memory_space<vmem>>, vector<8x128xf32>
    %c0_2 = arith.constant 0 : index
    %c0_3 = arith.constant 0 : index
    %4 = vector.load %arg3[%c0_2, %c0_3] : memref<128x128xf32, #tpu.memory_space<vmem>>, vector<128x128xf32>
    %cst = arith.constant dense<0.000000e+00> : vector<8x128xf32>
    %5 = tpu.matmul %3, %4, %cst {dimension_numbers = #tpu.dot_dimension_numbers<[1], [0], [0], [1], [0, 0, 1, 1], [], []>} : vector<8x128xf32>, vector<128x128xf32>, vector<8x128xf32> -> vector<8x128xf32>
    %c0_4 = arith.constant 0 : index
    %c0_5 = arith.constant 0 : index
    %6 = vector.load %arg4[%c0_4, %c0_5] : memref<128x128xf32, #tpu.memory_space<vmem>>, vector<128x128xf32>
    %cst_6 = arith.constant dense<0.000000e+00> : vector<8x128xf32>
    %7 = tpu.matmul %3, %6, %cst_6 {dimension_numbers = #tpu.dot_dimension_numbers<[1], [0], [0], [1], [0, 0, 1, 1], [], []>} : vector<8x128xf32>, vector<128x128xf32>, vector<8x128xf32> -> vector<8x128xf32>
    %cst_7 = arith.constant 5.000000e-01 : f32
    %8 = vector.broadcast %cst_7 : f32 to vector<8x128xf32>
    %9 = arith.mulf %8, %5 : vector<8x128xf32>
    %cst_8 = arith.constant 4.471500e-02 : f32
    %10 = vector.broadcast %cst_8 : f32 to vector<8x128xf32>
    %11 = arith.mulf %10, %5 : vector<8x128xf32>
    %12 = arith.mulf %11, %5 : vector<8x128xf32>
    %13 = arith.mulf %12, %5 : vector<8x128xf32>
    %14 = arith.addf %5, %13 : vector<8x128xf32>
    %cst_9 = arith.constant 0.797884583 : f32
    %15 = vector.broadcast %cst_9 : f32 to vector<8x128xf32>
    %16 = arith.mulf %15, %14 : vector<8x128xf32>
    %17 = math.tanh %16 : vector<8x128xf32>
    %cst_10 = arith.constant 1.000000e+00 : f32
    %18 = vector.broadcast %cst_10 : f32 to vector<8x128xf32>
    %19 = arith.addf %18, %17 : vector<8x128xf32>
    %20 = arith.mulf %9, %19 : vector<8x128xf32>
    %21 = arith.mulf %20, %7 : vector<8x128xf32>
    %c0_11 = arith.constant 0 : index
    %c0_12 = arith.constant 0 : index
    %22 = vector.load %arg7[%c0_11, %c0_12] : memref<8x128xf32, #tpu.memory_space<vmem>>, vector<8x128xf32>
    %c0_13 = arith.constant 0 : index
    %c0_14 = arith.constant 0 : index
    %23 = vector.load %arg5[%c0_13, %c0_14] : memref<128x128xf32, #tpu.memory_space<vmem>>, vector<128x128xf32>
    %cst_15 = arith.constant dense<0.000000e+00> : vector<8x128xf32>
    %24 = tpu.matmul %21, %23, %cst_15 {dimension_numbers = #tpu.dot_dimension_numbers<[1], [0], [0], [1], [0, 0, 1, 1], [], []>} : vector<8x128xf32>, vector<128x128xf32>, vector<8x128xf32> -> vector<8x128xf32>
    %25 = arith.addf %22, %24 : vector<8x128xf32>
    %c0_16 = arith.constant 0 : index
    %c0_17 = arith.constant 0 : index
    %26 = vector.load %arg7[%c0_16, %c0_17] : memref<8x128xf32, #tpu.memory_space<vmem>>, vector<8x128xf32>
    tpu.vector_store %arg7[%c0_16, %c0_17], %25 {strides = array<i32>} : memref<8x128xf32, #tpu.memory_space<vmem>>, vector<8x128xf32>,
    %c1_i32 = arith.constant 1 : i32
    %27 = arith.cmpi eq, %arg1, %c1_i32 : i32
    %28 = arith.extui %27 : i1 to i32
    %c0_i32_18 = arith.constant 0 : i32
    %29 = arith.cmpi ne, %28, %c0_i32_18 : i32
    scf.if %29 {
      %c0_19 = arith.constant 0 : index
      %c0_20 = arith.constant 0 : index
      %30 = vector.load %arg7[%c0_19, %c0_20] : memref<8x128xf32, #tpu.memory_space<vmem>>, vector<8x128xf32>
      %c0_21 = arith.constant 0 : index
      %c0_22 = arith.constant 0 : index
      %31 = vector.load %arg6[%c0_21, %c0_22] : memref<8x128xf32, #tpu.memory_space<vmem>>, vector<8x128xf32>
      tpu.vector_store %arg6[%c0_21, %c0_22], %30 {strides = array<i32>} : memref<8x128xf32, #tpu.memory_space<vmem>>, vector<8x128xf32>,
    } else {
    }
    return
  }
  func.func @transform_0(%arg0: i32, %arg1: i32) -> (i32, i32) {
    %c0_i32 = arith.constant 0 : i32
    %c0_i32_0 = arith.constant 0 : i32
    return %arg0, %c0_i32 : i32, i32
  }
  func.func @transform_1(%arg0: i32, %arg1: i32) -> (i32, i32) {
    %c0_i32 = arith.constant 0 : i32
    %c0_i32_0 = arith.constant 0 : i32
    return %c0_i32, %arg1 : i32, i32
  }
  func.func @transform_2(%arg0: i32, %arg1: i32) -> (i32, i32) {
    %c0_i32 = arith.constant 0 : i32
    %c0_i32_0 = arith.constant 0 : i32
    return %c0_i32, %arg1 : i32, i32
  }
  func.func @transform_3(%arg0: i32, %arg1: i32) -> (i32, i32) {
    %c0_i32 = arith.constant 0 : i32
    %c0_i32_0 = arith.constant 0 : i32
    return %arg1, %c0_i32 : i32, i32
  }
  func.func @transform_4(%arg0: i32, %arg1: i32) -> (i32, i32) {
    %c0_i32 = arith.constant 0 : i32
    %c0_i32_0 = arith.constant 0 : i32
    return %arg0, %c0_i32 : i32, i32
  }
}

</mosaic_0001>

<llo_original>
// kernel: tpu_custom_call.1
$region0: #{tpu_custom_call.1}
  #allocation0 [shape = 'u32[]', space=smem, size = 0x4, offset = 0x4, fixed_abs, tag = 'smem constant byte address 0x4 - core index']
  #allocation1 [shape = 'u32[144,128]{1,0:T(1,128)}', space=vmem, size = 0x12000, scoped, tag = 'internal scratch']
  #allocation2 [shape = 'f32[8,128]{1,0:T(8,128)}', space=vmem, size = 0x1000, scoped, tag = 'scratch operand']
  %s0 = inlined_call_operand.hbm [shape: f32[16,128], index: 0, kind: input, shape index: {}]
  %s1 = inlined_call_operand.hbm [shape: f32[128,256], index: 1, kind: input, shape index: {}]
  %s2 = inlined_call_operand.hbm [shape: f32[128,256], index: 2, kind: input, shape index: {}]
  %s3 = inlined_call_operand.hbm [shape: f32[256,128], index: 3, kind: input, shape index: {}]
  %s4 = inlined_call_operand.hbm [shape: f32[16,128], index: 4, kind: output, shape index: {}]
  %s5 = sld [smem:[#allocation0]]
  $region73: #{tpu_custom_call.1} parent=0
    _
  %s7 = ssub.s32 1, %s5
  %s8 = scalar_select 0, %s7, %s5
  $region1: #{tpu_custom_call.1} parent=0
    #allocation3 [shape = 'u8[8192]{0}', space=vmem, size = 0x2000, scoped, tag = 'input window, operand 0']
    #allocation4 [shape = 's32[2]{0}', space=sflag, size = 0x8, scoped, tag = 'scoped memory for tpu_custom_call.1']
    #allocation5 [shape = 's32[2]{0}', space=sflag, size = 0x8, scoped, tag = 'scoped memory for tpu_custom_call.1']
    #allocation6 [shape = 'u8[131072]{0}', space=vmem, size = 0x20000, scoped, tag = 'input window, operand 1']
    #allocation7 [shape = 's32[2]{0}', space=sflag, size = 0x8, scoped, tag = 'scoped memory for tpu_custom_call.1']
    #allocation8 [shape = 'u8[131072]{0}', space=vmem, size = 0x20000, scoped, tag = 'input window, operand 2']
    #allocation9 [shape = 'u8[131072]{0}', space=vmem, size = 0x20000, scoped, tag = 'input window, operand 3']
    #allocation10 [shape = 's32[2]{0}', space=sflag, size = 0x8, scoped, tag = 'scoped memory for tpu_custom_call.1']
    #allocation11 [shape = 'u8[8192]{0}', space=vmem, size = 0x2000, scoped, tag = 'output window, operand 0']
    %9 = vsyncpa [#allocation4], 0
    %s10 = scalar_lea.sflag [#allocation4], 1
    %11 = vsyncpa %s10, 0
    %12 = vsyncpa [#allocation7], 0
    %s13 = scalar_lea.sflag [#allocation7], 1
    %14 = vsyncpa %s13, 0
    %15 = vsyncpa [#allocation10], 0
    %s16 = scalar_lea.sflag [#allocation10], 1
    %17 = vsyncpa %s16, 0
    %18 = vsyncpa [#allocation5], 0
    %s19 = scalar_lea.sflag [#allocation5], 1
    %20 = vsyncpa %s19, 0
    loop: start=0, step=1, limit=6
    $region2: #{tpu_custom_call.1} parent=1 // loop_pre_header
      _
    $region3: #{tpu_custom_call.1} parent=1 // loop_header
      %s22 = sphi 0, %s26
      %p23 = scmp.ge.s32.totalorder %s22, 6
      %s29 = sphi 0, %s41
      %s30 = sphi 0, %s37
      %s31 = sphi 0, %s29
      %s32 = sphi 0, %s30
      %s33 = sphi 0, %s31
      %s34 = sphi 0, %s32
      %s44 = sphi 0, %s46
      %s47 = sphi 0, %s44
      %s48 = sphi 0, %s47
      %s64 = sphi 0, %s48
      %s70 = sphi 0, %s72
      %s73 = sphi 0, %s70
      %s74 = sphi 0, %s73
      %s90 = sphi 0, %s74
      %s96 = sphi 0, %s98
      %s99 = sphi 0, %s96
      %s100 = sphi 0, %s99
      %s116 = sphi 0, %s100
      %s122 = sphi 0, %s124
      %s125 = sphi 0, %s122
      %s126 = sphi 0, %s125
      %s142 = sphi 0, %s126
      %s148 = sphi 0, %s150
      %s151 = sphi 0, %s148
      %s152 = sphi 0, %s151
      %s168 = sphi 0, %s152
    $region4: #{tpu_custom_call.1} parent=1 // loop_header_branch
      %25 = sbr.rel (%p23) target = $region8
    $region5: #{tpu_custom_call.1} parent=1 // loop_body
      %s27 = ssub.s32 %s22, 1
      %s28 = ssub.s32 %s22, 2
      %s35 = sadd.s32 1, %s30
      %p36 = scmp.ge.s32.totalorder %s35, 2
      %s37 = scalar_select %p36, 0, %s35
      %s38 = sadd.s32 1, %s29
      %s39 = scalar_select %p36, %s38, %s29
      %p40 = scmp.ge.s32.totalorder %s39, 2
      %s41 = scalar_select %p40, 0, %s39
      %s42 = ssub.s32 %s29, %s41
      %p43 = scmp.eq.s32.totalorder %s42, 0
      %s45 = sadd.s32 %s44, 1
      %s46 = scalar_select %p43, %s44, %s45
      %p49 = pneg %p43
      %p50 = scmp.eq.s32.totalorder %s22, 3
      %p51 = por %p49, %p50
      %p52 = scmp.ne.s32.totalorder %s44, %s47
      %p53 = scmp.eq.s32.totalorder %s22, 0
      %p54 = por %p52, %p53
      %p55 = scmp.ne.s32.totalorder %s44, %s47
      %p56 = scmp.eq.s32.totalorder %s27, 3
      %p57 = por %p55, %p56
      %p58 = scmp.ne.s32.totalorder %s47, %s48
      %p59 = scmp.eq.s32.totalorder %s27, 0
      %p60 = por %p58, %p59
      %p61 = scmp.ne.s32.totalorder %s47, %s48
      %p62 = scmp.eq.s32.totalorder %s28, 3
      %p63 = por %p61, %p62
      %p65 = scmp.ne.s32.totalorder %s48, %s64
      %p66 = scmp.eq.s32.totalorder %s28, 0
      %p67 = por %p65, %p66
      %s68 = ssub.s32 %s30, %s37
      %p69 = scmp.eq.s32.totalorder %s68, 0
      %s71 = sadd.s32 %s70, 1
      %s72 = scalar_select %p69, %s70, %s71
      %p75 = pneg %p69
      %p76 = scmp.eq.s32.totalorder %s22, 3
      %p77 = por %p75, %p76
      %p78 = scmp.ne.s32.totalorder %s70, %s73
      %p79 = scmp.eq.s32.totalorder %s22, 0
      %p80 = por %p78, %p79
      %p81 = scmp.ne.s32.totalorder %s70, %s73
      %p82 = scmp.eq.s32.totalorder %s27, 3
      %p83 = por %p81, %p82
      %p84 = scmp.ne.s32.totalorder %s73, %s74
      %p85 = scmp.eq.s32.totalorder %s27, 0
      %p86 = por %p84, %p85
      %p87 = scmp.ne.s32.totalorder %s73, %s74
      %p88 = scmp.eq.s32.totalorder %s28, 3
      %p89 = por %p87, %p88
      %p91 = scmp.ne.s32.totalorder %s74, %s90
      %p92 = scmp.eq.s32.totalorder %s28, 0
      %p93 = por %p91, %p92
      %s94 = ssub.s32 %s30, %s37
      %p95 = scmp.eq.s32.totalorder %s94, 0
      %s97 = sadd.s32 %s96, 1
      %s98 = scalar_select %p95, %s96, %s97
      %p101 = pneg %p95
      %p102 = scmp.eq.s32.totalorder %s22, 3
      %p103 = por %p101, %p102
      %p104 = scmp.ne.s32.totalorder %s96, %s99
      %p105 = scmp.eq.s32.totalorder %s22, 0
      %p106 = por %p104, %p105
      %p107 = scmp.ne.s32.totalorder %s96, %s99
      %p108 = scmp.eq.s32.totalorder %s27, 3
      %p109 = por %p107, %p108
      %p110 = scmp.ne.s32.totalorder %s99, %s100
      %p111 = scmp.eq.s32.totalorder %s27, 0
      %p112 = por %p110, %p111
      %p113 = scmp.ne.s32.totalorder %s99, %s100
      %p114 = scmp.eq.s32.totalorder %s28, 3
      %p115 = por %p113, %p114
      %p117 = scmp.ne.s32.totalorder %s100, %s116
      %p118 = scmp.eq.s32.totalorder %s28, 0
      %p119 = por %p117, %p118
      %s120 = ssub.s32 %s30, %s37
      %p121 = scmp.eq.s32.totalorder %s120, 0
      %s123 = sadd.s32 %s122, 1
      %s124 = scalar_select %p121, %s122, %s123
      %p127 = pneg %p121
      %p128 = scmp.eq.s32.totalorder %s22, 3
      %p129 = por %p127, %p128
      %p130 = scmp.ne.s32.totalorder %s122, %s125
      %p131 = scmp.eq.s32.totalorder %s22, 0
      %p132 = por %p130, %p131
      %p133 = scmp.ne.s32.totalorder %s122, %s125
      %p134 = scmp.eq.s32.totalorder %s27, 3
      %p135 = por %p133, %p134
      %p136 = scmp.ne.s32.totalorder %s125, %s126
      %p137 = scmp.eq.s32.totalorder %s27, 0
      %p138 = por %p136, %p137
      %p139 = scmp.ne.s32.totalorder %s125, %s126
      %p140 = scmp.eq.s32.totalorder %s28, 3
      %p141 = por %p139, %p140
      %p143 = scmp.ne.s32.totalorder %s126, %s142
      %p144 = scmp.eq.s32.totalorder %s28, 0
      %p145 = por %p143, %p144
      %s146 = ssub.s32 %s29, %s41
      %p147 = scmp.eq.s32.totalorder %s146, 0
      %s149 = sadd.s32 %s148, 1
      %s150 = scalar_select %p147, %s148, %s149
      %p153 = pneg %p147
      %p154 = scmp.eq.s32.totalorder %s22, 3
      %p155 = por %p153, %p154
      %p156 = scmp.ne.s32.totalorder %s148, %s151
      %p157 = scmp.eq.s32.totalorder %s22, 0
      %p158 = por %p156, %p157
      %p159 = scmp.ne.s32.totalorder %s148, %s151
      %p160 = scmp.eq.s32.totalorder %s27, 3
      %p161 = por %p159, %p160
      %p162 = scmp.ne.s32.totalorder %s151, %s152
      %p163 = scmp.eq.s32.totalorder %s27, 0
      %p164 = por %p162, %p163
      %p165 = scmp.ne.s32.totalorder %s151, %s152
      %p166 = scmp.eq.s32.totalorder %s28, 3
      %p167 = por %p165, %p166
      %p169 = scmp.ne.s32.totalorder %s152, %s168
      %p170 = scmp.eq.s32.totalorder %s28, 0
      %p171 = por %p169, %p170
      %p172 = scmp.le.s32.totalorder 1, %s22
      %p173 = scmp.lt.s32.totalorder %s22, 5
      %p174 = pnand %p172, %p173
      %p175 = pneg %p174
      // Predicated region
      $region9: #{tpu_custom_call.1} parent=5 // pred_check
        _
      $region10: #{tpu_custom_call.1} parent=5 // pred_check_branch
        %177 = sbr.rel (%p174) target = $region12
      $region11: #{tpu_custom_call.1} parent=5 // pred_region
        %s178 = ssub.s32 %s22, 1
      $region12: #{tpu_custom_call.1} parent=5 // pred_fallthru
        _
      %p179 = scmp.lt.s32.totalorder %s22, 4
      // Predicated region
      $region13: #{tpu_custom_call.1} parent=5 // pred_check
        %p180 = pneg %p179
      $region14: #{tpu_custom_call.1} parent=5 // pred_check_branch
        %182 = sbr.rel (%p180) target = $region16
      $region15: #{tpu_custom_call.1} parent=5 // pred_region
        // Predicated region
        $region17: #{tpu_custom_call.1} parent=15 // pred_check
          %p183 = pneg %p54
        $region18: #{tpu_custom_call.1} parent=15 // pred_check_branch
          %185 = sbr.rel (%p183) target = $region20
        $region19: #{tpu_custom_call.1} parent=15 // pred_region
          %s186 = sand.u32 %s44, 1
          %s187 = scalar_lea.sflag [#allocation4], %s186
          %s188 = sand.u32 %s44, 1
          %s189 = smul.addr %s188, 8
          %s190 = scalar_lea.vmem [#allocation3], %s189
          %s192 = ssub.s32 128, 128
          %193 = vsyncadd %s187, %s192
          %s194 = smul.addr %s29, 128
          %s195 = scalar_lea.hbm %s0, %s194
          %s197 = sshll.u32 %s190, 4
          %s198 = int_to_ptr.vmem [resolvable:$true] %s197
          %200 = dma.hbm_to_vmem [thread:$0]  %s195, 128, %s198, %s187
        $region20: #{tpu_custom_call.1} parent=15 // pred_fallthru
          _
        // Predicated region
        $region21: #{tpu_custom_call.1} parent=15 // pred_check
          %p201 = pneg %p80
        $region22: #{tpu_custom_call.1} parent=15 // pred_check_branch
          %203 = sbr.rel (%p201) target = $region24
        $region23: #{tpu_custom_call.1} parent=15 // pred_region
          %s204 = sand.u32 %s22, 1
          %s205 = scalar_lea.sflag [#allocation7], %s204
          %s206 = sand.u32 %s70, 1
          %s207 = smul.addr %s206, 128
          %s208 = scalar_lea.vmem [#allocation6], %s207
          %s210 = ssub.s32 2048, 2048
          %211 = vsyncadd %s205, %s210
          %s212 = smul.addr %s30, 128
          %s213 = scalar_lea.hbm %s1, %s212
          %s214 = sshll.u32 %s208, 4
          %s215 = int_to_ptr.vmem [resolvable:$true] %s214
          %220 = dma.hbm_to_vmem [thread:$0]  %s213, 2048, %s215, %s205, 256, 128, 8
        $region24: #{tpu_custom_call.1} parent=15 // pred_fallthru
          _
        // Predicated region
        $region25: #{tpu_custom_call.1} parent=15 // pred_check
          %p221 = pneg %p106
        $region26: #{tpu_custom_call.1} parent=15 // pred_check_branch
          %223 = sbr.rel (%p221) target = $region28
        $region27: #{tpu_custom_call.1} parent=15 // pred_region
          %s224 = sand.u32 %s22, 1
          %s225 = scalar_lea.sflag [#allocation7], %s224
          %s226 = sand.u32 %s96, 1
          %s227 = smul.addr %s226, 128
          %s228 = scalar_lea.vmem [#allocation8], %s227
          %s230 = ssub.s32 2048, 2048
          %231 = vsyncadd %s225, %s230
          %s232 = smul.addr %s30, 128
          %s233 = scalar_lea.hbm %s2, %s232
          %s234 = sshll.u32 %s228, 4
          %s235 = int_to_ptr.vmem [resolvable:$true] %s234
          %240 = dma.hbm_to_vmem [thread:$0]  %s233, 2048, %s235, %s225, 256, 128, 8
        $region28: #{tpu_custom_call.1} parent=15 // pred_fallthru
          _
        // Predicated region
        $region29: #{tpu_custom_call.1} parent=15 // pred_check
          %p241 = pneg %p132
        $region30: #{tpu_custom_call.1} parent=15 // pred_check_branch
          %243 = sbr.rel (%p241) target = $region32
        $region31: #{tpu_custom_call.1} parent=15 // pred_region
          %s244 = sand.u32 %s122, 1
          %s245 = scalar_lea.sflag [#allocation10], %s244
          %s246 = sand.u32 %s122, 1
          %s247 = smul.addr %s246, 128
          %s248 = scalar_lea.vmem [#allocation9], %s247
          %s249 = smul.u32 16, %s30
          %s251 = ssub.s32 2048, 2048
          %252 = vsyncadd %s245, %s251
          %s253 = smul.addr %s249, 128
          %s254 = scalar_lea.hbm %s3, %s253
          %s255 = sshll.u32 %s248, 4
          %s256 = int_to_ptr.vmem [resolvable:$true] %s255
          %261 = dma.hbm_to_vmem [thread:$0]  %s254, 2048, %s256, %s245, 128, 128, 8
        $region32: #{tpu_custom_call.1} parent=15 // pred_fallthru
          _
      $region16: #{tpu_custom_call.1} parent=5 // pred_fallthru
        _
      %p262 = scmp.le.s32.totalorder 1, %s22
      %p263 = scmp.lt.s32.totalorder %s22, 5
      %p264 = pnand %p262, %p263
      %p265 = pneg %p264
      // Predicated region
      $region33: #{tpu_custom_call.1} parent=5 // pred_check
        _
      $region34: #{tpu_custom_call.1} parent=5 // pred_check_branch
        %267 = sbr.rel (%p264) target = $region36
      $region35: #{tpu_custom_call.1} parent=5 // pred_region
        %s268 = ssub.s32 %s22, 1
        %s269 = sand.u32 %s47, 1
        %s270 = scalar_lea.sflag [#allocation4], %s269
        %s271 = sand.u32 %s47, 1
        %s272 = smul.addr %s271, 8
        %s273 = scalar_lea.vmem [#allocation3], %s272
        // Predicated region
        $region37: #{tpu_custom_call.1} parent=35 // pred_check
          %p274 = pneg %p60
        $region38: #{tpu_custom_call.1} parent=35 // pred_check_branch
          %276 = sbr.rel (%p274) target = $region40
        $region39: #{tpu_custom_call.1} parent=35 // pred_region
          %277 = dma.done %s270, 128
        $region40: #{tpu_custom_call.1} parent=35 // pred_fallthru
          _
        %s278 = sand.u32 %s27, 1
        %s279 = scalar_lea.sflag [#allocation7], %s278
        %s280 = sand.u32 %s73, 1
        %s281 = smul.addr %s280, 128
        %s282 = scalar_lea.vmem [#allocation6], %s281
        // Predicated region
        $region41: #{tpu_custom_call.1} parent=35 // pred_check
          %p283 = pneg %p86
        $region42: #{tpu_custom_call.1} parent=35 // pred_check_branch
          %285 = sbr.rel (%p283) target = $region44
        $region43: #{tpu_custom_call.1} parent=35 // pred_region
          %286 = dma.done %s279, 2048
        $region44: #{tpu_custom_call.1} parent=35 // pred_fallthru
          _
        %s287 = sand.u32 %s27, 1
        %s288 = scalar_lea.sflag [#allocation7], %s287
        %s289 = sand.u32 %s99, 1
        %s290 = smul.addr %s289, 128
        %s291 = scalar_lea.vmem [#allocation8], %s290
        // Predicated region
        $region45: #{tpu_custom_call.1} parent=35 // pred_check
          %p292 = pneg %p112
        $region46: #{tpu_custom_call.1} parent=35 // pred_check_branch
          %294 = sbr.rel (%p292) target = $region48
        $region47: #{tpu_custom_call.1} parent=35 // pred_region
          %295 = dma.done %s288, 2048
        $region48: #{tpu_custom_call.1} parent=35 // pred_fallthru
          _
        %s296 = sand.u32 %s125, 1
        %s297 = scalar_lea.sflag [#allocation10], %s296
        %s298 = sand.u32 %s125, 1
        %s299 = smul.addr %s298, 128
        %s300 = scalar_lea.vmem [#allocation9], %s299
        // Predicated region
        $region49: #{tpu_custom_call.1} parent=35 // pred_check
          %p301 = pneg %p138
        $region50: #{tpu_custom_call.1} parent=35 // pred_check_branch
          %303 = sbr.rel (%p301) target = $region52
        $region51: #{tpu_custom_call.1} parent=35 // pred_region
          %304 = dma.done %s297, 2048
        $region52: #{tpu_custom_call.1} parent=35 // pred_fallthru
          _
        %s305 = sand.u32 %s47, 1
        %s306 = scalar_lea.sflag [#allocation4], %s305
        %s307 = sand.u32 %s47, 1
        %s308 = smul.addr %s307, 8
        %s309 = scalar_lea.vmem [#allocation3], %s308
        %p310 = pneg %p60
        %p311 = pneg %p57
        %s312 = sand.u32 %s27, 1
        %s313 = scalar_lea.sflag [#allocation7], %s312
        %s314 = sand.u32 %s73, 1
        %s315 = smul.addr %s314, 128
        %s316 = scalar_lea.vmem [#allocation6], %s315
        %p317 = pneg %p86
        %p318 = pneg %p83
        %s319 = sand.u32 %s27, 1
        %s320 = scalar_lea.sflag [#allocation7], %s319
        %s321 = sand.u32 %s99, 1
        %s322 = smul.addr %s321, 128
        %s323 = scalar_lea.vmem [#allocation8], %s322
        %p324 = pneg %p112
        %p325 = pneg %p109
        %s326 = sand.u32 %s125, 1
        %s327 = scalar_lea.sflag [#allocation10], %s326
        %s328 = sand.u32 %s125, 1
        %s329 = smul.addr %s328, 128
        %s330 = scalar_lea.vmem [#allocation9], %s329
        %p331 = pneg %p138
        %p332 = pneg %p135
        %p333 = pneg %p164
        %p334 = pneg %p161
        %s335 = sand.u32 %s151, 1
        %s336 = scalar_lea.sflag [#allocation5], %s335
        %s337 = sand.u32 %s151, 1
        %s338 = smul.addr %s337, 8
        %s339 = scalar_lea.vmem [#allocation11], %s338
        %s340 = smul.u32 16, %s32
        %p341 = scmp.eq.s32.totalorder %s32, 0
        // Predicated region
        $region53: #{tpu_custom_call.1} parent=35 // pred_check
          %p342 = pneg %p341
        $region54: #{tpu_custom_call.1} parent=35 // pred_check_branch
          %344 = sbr.rel (%p342) target = $region56
        $region55: #{tpu_custom_call.1} parent=35 // pred_region
          %345 = vst [vmem:[#allocation2] sm:$0xff] 0.0
        $region56: #{tpu_custom_call.1} parent=35 // pred_fallthru
          _
        %v346 = vld [vmem:[%s273] sm:$0xff]
        %v347 = vld [vmem:[%s282] sm:$0xff]
        %v348 = vld [vmem:[%s282 + $0x8] sm:$0xff]
        %v349 = vld [vmem:[%s282 + $0x10] sm:$0xff]
        %v350 = vld [vmem:[%s282 + $0x18] sm:$0xff]
        %v351 = vld [vmem:[%s282 + $0x20] sm:$0xff]
        %v352 = vld [vmem:[%s282 + $0x28] sm:$0xff]
        %v353 = vld [vmem:[%s282 + $0x30] sm:$0xff]
        %v354 = vld [vmem:[%s282 + $0x38] sm:$0xff]
        %v355 = vld [vmem:[%s282 + $0x40] sm:$0xff]
        %v356 = vld [vmem:[%s282 + $0x48] sm:$0xff]
        %v357 = vld [vmem:[%s282 + $0x50] sm:$0xff]
        %v358 = vld [vmem:[%s282 + $0x58] sm:$0xff]
        %v359 = vld [vmem:[%s282 + $0x60] sm:$0xff]
        %v360 = vld [vmem:[%s282 + $0x68] sm:$0xff]
        %v361 = vld [vmem:[%s282 + $0x70] sm:$0xff]
        %v362 = vld [vmem:[%s282 + $0x78] sm:$0xff]
        %363 = vmatprep.subr.mxu0 0.0
        %364 = vmatpush1.msra.mxu0 %v347
        %365 = vmatprep.subr.mxu0 0.0
        %366 = vmatpush1.msra.mxu0 %v348
        %367 = vmatprep.subr.mxu0 0.0
        %368 = vmatpush1.msra.mxu0 %v349
        %369 = vmatprep.subr.mxu0 0.0
        %370 = vmatpush1.msra.mxu0 %v350
        %371 = vmatprep.subr.mxu0 0.0
        %372 = vmatpush1.msra.mxu0 %v351
        %373 = vmatprep.subr.mxu0 0.0
        %374 = vmatpush1.msra.mxu0 %v352
        %375 = vmatprep.subr.mxu0 0.0
        %376 = vmatpush1.msra.mxu0 %v353
        %377 = vmatprep.subr.mxu0 0.0
        %378 = vmatpush1.msra.mxu0 %v354
        %379 = vmatprep.subr.mxu0 0.0
        %380 = vmatpush1.msra.mxu0 %v355
        %381 = vmatprep.subr.mxu0 0.0
        %382 = vmatpush1.msra.mxu0 %v356
        %383 = vmatprep.subr.mxu0 0.0
        %384 = vmatpush1.msra.mxu0 %v357
        %385 = vmatprep.subr.mxu0 0.0
        %386 = vmatpush1.msra.mxu0 %v358
        %387 = vmatprep.subr.mxu0 0.0
        %388 = vmatpush1.msra.mxu0 %v359
        %389 = vmatprep.subr.mxu0 0.0
        %390 = vmatpush1.msra.mxu0 %v360
        %391 = vmatprep.subr.mxu0 0.0
        %392 = vmatpush1.msra.mxu0 %v361
        %393 = vmatprep.subr.mxu0 0.0
        %394 = vmatpush1.msra.mxu0 %v362
        %395 = vmatprep.subr.mxu0 0.0
        %396 = vmatpush1.msra.mxu0 0.0
        %397 = vmatprep.subr.mxu0 0.0
        %398 = vmatpush1.msra.mxu0 0.0
        %399 = vmatprep.subr.mxu0 0.0
        %400 = vmatpush1.msra.mxu0 0.0
        %401 = vmatprep.subr.mxu0 0.0
        %402 = vmatpush1.msra.mxu0 0.0
        %403 = vmatprep.subr.mxu0 0.0
        %404 = vmatpush1.msra.mxu0 0.0
        %405 = vmatprep.subr.mxu0 0.0
        %406 = vmatpush1.msra.mxu0 0.0
        %407 = vmatprep.subr.mxu0 0.0
        %408 = vmatpush1.msra.mxu0 0.0
        %409 = vmatprep.subr.mxu0 0.0
        %410 = vmatpush1.msra.mxu0 0.0
        %411 = vmatprep.subr.mxu0 0.0
        %412 = vmatpush1.msra.mxu0 0.0
        %413 = vmatprep.subr.mxu0 0.0
        %414 = vmatpush1.msra.mxu0 0.0
        %415 = vmatprep.subr.mxu0 0.0
        %416 = vmatpush1.msra.mxu0 0.0
        %417 = vmatprep.subr.mxu0 0.0
        %418 = vmatpush1.msra.mxu0 0.0
        %419 = vmatprep.subr.mxu0 0.0
        %420 = vmatpush1.msra.mxu0 0.0
        %421 = vmatprep.subr.mxu0 0.0
        %422 = vmatpush1.msra.mxu0 0.0
        %423 = vmatprep.subr.mxu0 0.0
        %424 = vmatpush1.msra.mxu0 0.0
        %425 = vmatprep.subr.mxu0 0.0
        %426 = vmatpush1.msra.mxu0 0.0
        %427 = vmatprep.mubr.f32.mxu0 0.0
        %428 = vmatmul.mubr.f32.gmra.mrb[0].mxu0 %v346
        %v429 = vpop.f32.mrb[0].mxu0
        %v430 = vadd.f32 0.0, %v429
        %v431 = vpop.f32.mrb[0].mxu0
        %432 = vdwg.mxu0
        %v433 = vld [vmem:[%s291] sm:$0xff]
        %v434 = vld [vmem:[%s291 + $0x8] sm:$0xff]
        %v435 = vld [vmem:[%s291 + $0x10] sm:$0xff]
        %v436 = vld [vmem:[%s291 + $0x18] sm:$0xff]
        %v437 = vld [vmem:[%s291 + $0x20] sm:$0xff]
        %v438 = vld [vmem:[%s291 + $0x28] sm:$0xff]
        %v439 = vld [vmem:[%s291 + $0x30] sm:$0xff]
        %v440 = vld [vmem:[%s291 + $0x38] sm:$0xff]
        %v441 = vld [vmem:[%s291 + $0x40] sm:$0xff]
        %v442 = vld [vmem:[%s291 + $0x48] sm:$0xff]
        %v443 = vld [vmem:[%s291 + $0x50] sm:$0xff]
        %v444 = vld [vmem:[%s291 + $0x58] sm:$0xff]
        %v445 = vld [vmem:[%s291 + $0x60] sm:$0xff]
        %v446 = vld [vmem:[%s291 + $0x68] sm:$0xff]
        %v447 = vld [vmem:[%s291 + $0x70] sm:$0xff]
        %v448 = vld [vmem:[%s291 + $0x78] sm:$0xff]
        %449 = vmatprep.subr.mxu0 0.0
        %450 = vmatpush1.msra.mxu0 %v433
        %451 = vmatprep.subr.mxu0 0.0
        %452 = vmatpush1.msra.mxu0 %v434
        %453 = vmatprep.subr.mxu0 0.0
        %454 = vmatpush1.msra.mxu0 %v435
        %455 = vmatprep.subr.mxu0 0.0
        %456 = vmatpush1.msra.mxu0 %v436
        %457 = vmatprep.subr.mxu0 0.0
        %458 = vmatpush1.msra.mxu0 %v437
        %459 = vmatprep.subr.mxu0 0.0
        %460 = vmatpush1.msra.mxu0 %v438
        %461 = vmatprep.subr.mxu0 0.0
        %462 = vmatpush1.msra.mxu0 %v439
        %463 = vmatprep.subr.mxu0 0.0
        %464 = vmatpush1.msra.mxu0 %v440
        %465 = vmatprep.subr.mxu0 0.0
        %466 = vmatpush1.msra.mxu0 %v441
        %467 = vmatprep.subr.mxu0 0.0
        %468 = vmatpush1.msra.mxu0 %v442
        %469 = vmatprep.subr.mxu0 0.0
        %470 = vmatpush1.msra.mxu0 %v443
        %471 = vmatprep.subr.mxu0 0.0
        %472 = vmatpush1.msra.mxu0 %v444
        %473 = vmatprep.subr.mxu0 0.0
        %474 = vmatpush1.msra.mxu0 %v445
        %475 = vmatprep.subr.mxu0 0.0
        %476 = vmatpush1.msra.mxu0 %v446
        %477 = vmatprep.subr.mxu0 0.0
        %478 = vmatpush1.msra.mxu0 %v447
        %479 = vmatprep.subr.mxu0 0.0
        %480 = vmatpush1.msra.mxu0 %v448
        %481 = vmatprep.subr.mxu0 0.0
        %482 = vmatpush1.msra.mxu0 0.0
        %483 = vmatprep.subr.mxu0 0.0
        %484 = vmatpush1.msra.mxu0 0.0
        %485 = vmatprep.subr.mxu0 0.0
        %486 = vmatpush1.msra.mxu0 0.0
        %487 = vmatprep.subr.mxu0 0.0
        %488 = vmatpush1.msra.mxu0 0.0
        %489 = vmatprep.subr.mxu0 0.0
        %490 = vmatpush1.msra.mxu0 0.0
        %491 = vmatprep.subr.mxu0 0.0
        %492 = vmatpush1.msra.mxu0 0.0
        %493 = vmatprep.subr.mxu0 0.0
        %494 = vmatpush1.msra.mxu0 0.0
        %495 = vmatprep.subr.mxu0 0.0
        %496 = vmatpush1.msra.mxu0 0.0
        %497 = vmatprep.subr.mxu0 0.0
        %498 = vmatpush1.msra.mxu0 0.0
        %499 = vmatprep.subr.mxu0 0.0
        %500 = vmatpush1.msra.mxu0 0.0
        %501 = vmatprep.subr.mxu0 0.0
        %502 = vmatpush1.msra.mxu0 0.0
        %503 = vmatprep.subr.mxu0 0.0
        %504 = vmatpush1.msra.mxu0 0.0
        %505 = vmatprep.subr.mxu0 0.0
        %506 = vmatpush1.msra.mxu0 0.0
        %507 = vmatprep.subr.mxu0 0.0
        %508 = vmatpush1.msra.mxu0 0.0
        %509 = vmatprep.subr.mxu0 0.0
        %510 = vmatpush1.msra.mxu0 0.0
        %511 = vmatprep.subr.mxu0 0.0
        %512 = vmatpush1.msra.mxu0 0.0
        %513 = vmatprep.mubr.f32.mxu0 0.0
        %514 = vmatmul.mubr.f32.gmra.mrb[0].mxu0 %v346
        %v515 = vpop.f32.mrb[0].mxu0
        %v516 = vadd.f32 0.0, %v515
        %v517 = vpop.f32.mrb[0].mxu0
        %518 = vdwg.mxu0
        %v519 = vmul.f32 %v430, 0.5
        %v520 = vmul.f32 %v430, 0.044715
        %v521 = vmul.f32 %v520, %v430
        %v522 = vmul.f32 %v521, %v430
        %v523 = vadd.f32 %v430, %v522
        %v524 = vmul.f32 %v523, 0.7978846
        %v525 = vtanh.pop %v524
        %v526 = vadd.f32 %v525, 1.0
        %v527 = vmul.f32 %v519, %v526
        %v528 = vmul.f32 %v527, %v516
        %v529 = vld [vmem:[#allocation2] sm:$0xff]
        %v530 = vld [vmem:[%s300] sm:$0xff]
        %v531 = vld [vmem:[%s300 + $0x8] sm:$0xff]
        %v532 = vld [vmem:[%s300 + $0x10] sm:$0xff]
        %v533 = vld [vmem:[%s300 + $0x18] sm:$0xff]
        %v534 = vld [vmem:[%s300 + $0x20] sm:$0xff]
        %v535 = vld [vmem:[%s300 + $0x28] sm:$0xff]
        %v536 = vld [vmem:[%s300 + $0x30] sm:$0xff]
        %v537 = vld [vmem:[%s300 + $0x38] sm:$0xff]
        %v538 = vld [vmem:[%s300 + $0x40] sm:$0xff]
        %v539 = vld [vmem:[%s300 + $0x48] sm:$0xff]
        %v540 = vld [vmem:[%s300 + $0x50] sm:$0xff]
        %v541 = vld [vmem:[%s300 + $0x58] sm:$0xff]
        %v542 = vld [vmem:[%s300 + $0x60] sm:$0xff]
        %v543 = vld [vmem:[%s300 + $0x68] sm:$0xff]
        %v544 = vld [vmem:[%s300 + $0x70] sm:$0xff]
        %v545 = vld [vmem:[%s300 + $0x78] sm:$0xff]
        %546 = vmatprep.subr.mxu0 0.0
        %547 = vmatpush1.msra.mxu0 %v530
        %548 = vmatprep.subr.mxu0 0.0
        %549 = vmatpush1.msra.mxu0 %v531
        %550 = vmatprep.subr.mxu0 0.0
        %551 = vmatpush1.msra.mxu0 %v532
        %552 = vmatprep.subr.mxu0 0.0
        %553 = vmatpush1.msra.mxu0 %v533
        %554 = vmatprep.subr.mxu0 0.0
        %555 = vmatpush1.msra.mxu0 %v534
        %556 = vmatprep.subr.mxu0 0.0
        %557 = vmatpush1.msra.mxu0 %v535
        %558 = vmatprep.subr.mxu0 0.0
        %559 = vmatpush1.msra.mxu0 %v536
        %560 = vmatprep.subr.mxu0 0.0
        %561 = vmatpush1.msra.mxu0 %v537
        %562 = vmatprep.subr.mxu0 0.0
        %563 = vmatpush1.msra.mxu0 %v538
        %564 = vmatprep.subr.mxu0 0.0
        %565 = vmatpush1.msra.mxu0 %v539
        %566 = vmatprep.subr.mxu0 0.0
        %567 = vmatpush1.msra.mxu0 %v540
        %568 = vmatprep.subr.mxu0 0.0
        %569 = vmatpush1.msra.mxu0 %v541
        %570 = vmatprep.subr.mxu0 0.0
        %571 = vmatpush1.msra.mxu0 %v542
        %572 = vmatprep.subr.mxu0 0.0
        %573 = vmatpush1.msra.mxu0 %v543
        %574 = vmatprep.subr.mxu0 0.0
        %575 = vmatpush1.msra.mxu0 %v544
        %576 = vmatprep.subr.mxu0 0.0
        %577 = vmatpush1.msra.mxu0 %v545
        %578 = vmatprep.subr.mxu0 0.0
        %579 = vmatpush1.msra.mxu0 0.0
        %580 = vmatprep.subr.mxu0 0.0
        %581 = vmatpush1.msra.mxu0 0.0
        %582 = vmatprep.subr.mxu0 0.0
        %583 = vmatpush1.msra.mxu0 0.0
        %584 = vmatprep.subr.mxu0 0.0
        %585 = vmatpush1.msra.mxu0 0.0
        %586 = vmatprep.subr.mxu0 0.0
        %587 = vmatpush1.msra.mxu0 0.0
        %588 = vmatprep.subr.mxu0 0.0
        %589 = vmatpush1.msra.mxu0 0.0
        %590 = vmatprep.subr.mxu0 0.0
        %591 = vmatpush1.msra.mxu0 0.0
        %592 = vmatprep.subr.mxu0 0.0
        %593 = vmatpush1.msra.mxu0 0.0
        %594 = vmatprep.subr.mxu0 0.0
        %595 = vmatpush1.msra.mxu0 0.0
        %596 = vmatprep.subr.mxu0 0.0
        %597 = vmatpush1.msra.mxu0 0.0
        %598 = vmatprep.subr.mxu0 0.0
        %599 = vmatpush1.msra.mxu0 0.0
        %600 = vmatprep.subr.mxu0 0.0
        %601 = vmatpush1.msra.mxu0 0.0
        %602 = vmatprep.subr.mxu0 0.0
        %603 = vmatpush1.msra.mxu0 0.0
        %604 = vmatprep.subr.mxu0 0.0
        %605 = vmatpush1.msra.mxu0 0.0
        %606 = vmatprep.subr.mxu0 0.0
        %607 = vmatpush1.msra.mxu0 0.0
        %608 = vmatprep.subr.mxu0 0.0
        %609 = vmatpush1.msra.mxu0 0.0
        %610 = vmatprep.mubr.f32.mxu0 0.0
        %611 = vmatmul.mubr.f32.gmra.mrb[0].mxu0 %v528
        %v612 = vpop.f32.mrb[0].mxu0
        %v613 = vadd.f32 0.0, %v612
        %v614 = vpop.f32.mrb[0].mxu0
        %615 = vdwg.mxu0
        %v616 = vadd.f32 %v529, %v613
        %617 = vst [vmem:[#allocation2] sm:$0xff] %v616
        %p618 = scmp.eq.s32.totalorder %s32, 1
        // Predicated region
        $region57: #{tpu_custom_call.1} parent=35 // pred_check
          %p619 = pneg %p618
        $region58: #{tpu_custom_call.1} parent=35 // pred_check_branch
          %621 = sbr.rel (%p619) target = $region60
        $region59: #{tpu_custom_call.1} parent=35 // pred_region
          %v622 = vld [vmem:[#allocation2] sm:$0xff]
          %623 = vst [vmem:[%s339] sm:$0xff] %v622
        $region60: #{tpu_custom_call.1} parent=35 // pred_fallthru
          _
        %s624 = sand.u32 %s151, 1
        %s625 = scalar_lea.sflag [#allocation5], %s624
        %s626 = sand.u32 %s151, 1
        %s627 = smul.addr %s626, 8
        %s628 = scalar_lea.vmem [#allocation11], %s627
        // Predicated region
        $region61: #{tpu_custom_call.1} parent=35 // pred_check
          %p629 = pneg %p161
        $region62: #{tpu_custom_call.1} parent=35 // pred_check_branch
          %631 = sbr.rel (%p629) target = $region64
        $region63: #{tpu_custom_call.1} parent=35 // pred_region
          %s633 = ssub.s32 128, 128
          %634 = vsyncadd %s625, %s633
          %s635 = smul.addr %s31, 128
          %s636 = scalar_lea.hbm %s4, %s635
          %s638 = sshll.u32 %s628, 4
          %s639 = int_to_ptr.vmem [resolvable:$true] %s638
          %641 = dma.vmem_to_hbm [thread:$0]  %s639, 128, %s636, %s625
        $region64: #{tpu_custom_call.1} parent=35 // pred_fallthru
          _
      $region36: #{tpu_custom_call.1} parent=5 // pred_fallthru
        _
      %p642 = scmp.le.s32.totalorder 2, %s22
      // Predicated region
      $region65: #{tpu_custom_call.1} parent=5 // pred_check
        %p643 = pneg %p642
      $region66: #{tpu_custom_call.1} parent=5 // pred_check_branch
        %645 = sbr.rel (%p643) target = $region68
      $region67: #{tpu_custom_call.1} parent=5 // pred_region
        %s646 = ssub.s32 %s22, 2
        // Predicated region
        $region69: #{tpu_custom_call.1} parent=67 // pred_check
          %p647 = pneg %p167
        $region70: #{tpu_custom_call.1} parent=67 // pred_check_branch
          %649 = sbr.rel (%p647) target = $region72
        $region71: #{tpu_custom_call.1} parent=67 // pred_region
          %s650 = sand.u32 %s152, 1
          %s651 = scalar_lea.sflag [#allocation5], %s650
          %s652 = sand.u32 %s152, 1
          %s653 = smul.addr %s652, 8
          %s654 = scalar_lea.vmem [#allocation11], %s653
          %655 = dma.done %s651, 128
        $region72: #{tpu_custom_call.1} parent=67 // pred_fallthru
          _
      $region68: #{tpu_custom_call.1} parent=5 // pred_fallthru
        _
    $region6: #{tpu_custom_call.1} parent=1 // loop_footer
      %s26 = sadd.s32 1, %s22
    $region7: #{tpu_custom_call.1} parent=1 // loop_footer_branch
      %21 = sbr.rel target = $region3
    $region8: #{tpu_custom_call.1} parent=1 // loop_exit
      _
    %656 = vsyncpa [#allocation4], 1
    %s657 = scalar_lea.sflag [#allocation4], 1
    %658 = vsyncpa %s657, 1
    %659 = vsyncpa [#allocation7], 1
    %s660 = scalar_lea.sflag [#allocation7], 1
    %661 = vsyncpa %s660, 1
    %662 = vsyncpa [#allocation10], 1
    %s663 = scalar_lea.sflag [#allocation10], 1
    %664 = vsyncpa %s663, 1
    %665 = vsyncpa [#allocation5], 1
    %s666 = scalar_lea.sflag [#allocation5], 1
    %667 = vsyncpa %s666, 1

</llo_original>
